<compile_context>
chip_gen: v5e
topology: v5e:2x2
jax: 0.10.0
libtpu: 0.0.40
codegen_flags: <defaults>
</compile_context>

<pallas_src>
import functools

import jax
import jax.numpy as jnp
from jax.experimental import pallas as pl
from jax.experimental.pallas import tpu as pltpu


def _round_up(x: int, m: int) -> int:
    return ((x + m - 1) // m) * m


# ------------------------------- kernels ------------------------------------

def _critic_kernel_fused(obs_ref, act_ref,
                         w1o_ref, w1a_ref, b1_ref,
                         w2_ref, b2_ref,
                         w3_ref, b3_ref,
                         q_ref):
    """Twin MLP, layer 2 fused via block-diagonal [2H, 2H] weight.

    obs_ref: [TB, F] f32, act_ref: [TB, A] f32 (cast to compute dtype here)
    w1o_ref: [F, 2H], w1a_ref: [A, 2H], w2_ref: [2H, 2H] (block-diag),
    w3_ref: [2H, 2] (block), biases f32.  q_ref: [TB, 2] f32 (q1, q2).
    """
    cdt = w1o_ref.dtype
    # Layer 1: fused concat -> obs @ W1[:F] + action @ W1[F:] (f32 accumulate).
    # Kept as two dots: F and A are tiny, and a (TB, F+A) scratch copy would
    # need a non-lane-aligned store for negligible gain.
    h = (jnp.dot(obs_ref[...].astype(cdt), w1o_ref[...],
                 preferred_element_type=jnp.float32)
         + jnp.dot(act_ref[...].astype(cdt), w1a_ref[...],
                   preferred_element_type=jnp.float32)
         + b1_ref[...])
    h = jnp.maximum(h, 0.0)

    # Layer 2: both heads in one MXU issue (free while 2H <= MXU width).
    h = jnp.dot(h.astype(cdt), w2_ref[...],
                preferred_element_type=jnp.float32) + b2_ref[...]
    h = jnp.maximum(h, 0.0)

    # Layer 3: single [2H, 2] dot -> lane-packed (q1, q2).
    q_ref[...] = jnp.dot(h.astype(cdt), w3_ref[...],
                         preferred_element_type=jnp.float32) + b3_ref[...]


def _critic_kernel_split(H, obs_ref, act_ref,
                         w1o_ref, w1a_ref, b1_ref,
                         w2_ref, b2_ref,
                         w3_ref, b3_ref,
                         q_ref):
    """Twin MLP, layer 2 split into two [TB,H]@[H,H] dots (H % 128 == 0).

    w2_ref: [2, H, H] (per-head weights stacked).  Avoids the 2x redundant
    MACs of the block-diagonal trick once 2H exceeds the MXU width.
    """
    cdt = w1o_ref.dtype
    h = (jnp.dot(obs_ref[...].astype(cdt), w1o_ref[...],
                 preferred_element_type=jnp.float32)
         + jnp.dot(act_ref[...].astype(cdt), w1a_ref[...],
                   preferred_element_type=jnp.float32)
         + b1_ref[...])
    h = jnp.maximum(h, 0.0)

    b2 = b2_ref[...]
    h1 = jnp.dot(h[:, :H].astype(cdt), w2_ref[0],
                 preferred_element_type=jnp.float32) + b2[:, :H]
    h2 = jnp.dot(h[:, H:].astype(cdt), w2_ref[1],
                 preferred_element_type=jnp.float32) + b2[:, H:]
    h = jnp.concatenate([jnp.maximum(h1, 0.0), jnp.maximum(h2, 0.0)], axis=1)

    q_ref[...] = jnp.dot(h.astype(cdt), w3_ref[...],
                         preferred_element_type=jnp.float32) + b3_ref[...]


# --------------------------- parameter packing -------------------------------

def pack_critic_params(params, n_features, *,
                       compute_dtype=jnp.float32,
                       l2_fuse_max: int = 256):
    """Pack twin-head weights ONCE per parameter update (not per forward).

    l2_fuse_max: keep the block-diagonal layer-2 fusion while 2H <= this
    (use 128 on v5e, 256 on v6e/v7x).  When 2H exceeds it and H % 128 == 0,
    layer 2 is split into two per-head dots instead.
    """
    p1, p2 = params["q1"], params["q2"]
    F = n_features
    H = p1["w1"].shape[1]
    fuse_l2 = (2 * H <= l2_fuse_max) or (H % 128 != 0)

    w1 = jnp.concatenate([p1["w1"], p2["w1"]], axis=1)            # [F+A, 2H]
    w1o = w1[:F].astype(compute_dtype)                            # [F, 2H]
    w1a = w1[F:].astype(compute_dtype)                            # [A, 2H]
    b1 = jnp.concatenate([p1["b1"], p2["b1"]], axis=1).astype(jnp.float32)

    if fuse_l2:
        zhh = jnp.zeros((H, H), jnp.float32)
        w2 = jnp.block([[p1["w2"], zhh],
                        [zhh, p2["w2"]]]).astype(compute_dtype)   # [2H, 2H]
    else:
        w2 = jnp.stack([p1["w2"], p2["w2"]], axis=0).astype(compute_dtype)  # [2, H, H]
    b2 = jnp.concatenate([p1["b2"], p2["b2"]], axis=1).astype(jnp.float32)

    zh1 = jnp.zeros((H, 1), jnp.float32)
    w3 = jnp.block([[p1["w3"], zh1],
                    [zh1, p2["w3"]]]).astype(compute_dtype)       # [2H, 2]
    b3 = jnp.concatenate([p1["b3"], p2["b3"]], axis=1).astype(jnp.float32)

    return {"w1o": w1o, "w1a": w1a, "b1": b1,
            "w2": w2, "b2": b2, "w3": w3, "b3": b3,
            "hidden_size": H, "fuse_l2": fuse_l2,
            "n_features": F, "n_actions": w1a.shape[0]}


# ------------------------------ forward --------------------------------------

def _vmem_limit_bytes(TB, F, A, H, fuse_l2, w_itemsize):
    io_bytes = 2 * TB * (F + A) * 4 + 2 * TB * 2 * 4        # double-buffered I/O
    w2_elems = (2 * H) * (2 * H) if fuse_l2 else 2 * H * H
    w_bytes = 2 * ((F + A) * 2 * H + w2_elems + 2 * H * 2) * w_itemsize
    b_bytes = 2 * (4 * H + 2) * 4
    scratch = 4 * TB * 2 * H * 4                             # activations headroom
    est = io_bytes + w_bytes + b_bytes + scratch
    return int(min(max(2 * est, 16 << 20), 64 << 20))


def critic_forward(obs, action, packed, *,
                   block_b: int = 1024,
                   num_cores_hint: int = 2):
    """Twin-critic forward with pre-packed weights. Returns (q1, q2), each [B, 1] f32."""
    obs = jnp.asarray(obs, jnp.float32)        # NO compute-dtype cast here
    action = jnp.asarray(action, jnp.float32)  # (in-kernel cast is free)
    B, F = obs.shape
    A = action.shape[1]
    H = packed["hidden_size"]
    fuse_l2 = packed["fuse_l2"]
    w_itemsize = jnp.dtype(packed["w1o"].dtype).itemsize

    # Batch tile: as large as block_b allows, but split so the grid has >= 2
    # tiles (v7x megacore) when the batch is big enough. No jnp.pad: Pallas
    # handles the ragged last block; garbage rows are sliced off below.
    target = pl.cdiv(B, max(1, num_cores_hint))
    TB = _round_up(min(block_b, max(target, 8)), 8)
    TB = min(TB, _round_up(B, 8))
    grid = (pl.cdiv(B, TB),)

    def _const(shape):
        # Weights/biases resident across batch tiles (index constant).
        # NOTE: still double-buffered by default; negligible at these sizes.
        return pl.BlockSpec(shape, lambda i: tuple(0 for _ in shape))

    if fuse_l2:
        kernel = _critic_kernel_fused
        w2_spec = _const((2 * H, 2 * H))
    else:
        kernel = functools.partial(_critic_kernel_split, H)
        w2_spec = _const((2, H, H))

    q = pl.pallas_call(
        kernel,
        out_shape=jax.ShapeDtypeStruct((B, 2), jnp.float32),
        grid=grid,
        in_specs=[
            pl.BlockSpec((TB, F), lambda i: (i, 0)),   # obs tile (f32)
            pl.BlockSpec((TB, A), lambda i: (i, 0)),   # action tile (f32)
            _const((F, 2 * H)),                        # w1 (obs part)
            _const((A, 2 * H)),                        # w1 (action part)
            _const((1, 2 * H)),                        # b1
            w2_spec,                                   # w2 (fused or stacked)
            _const((1, 2 * H)),                        # b2
            _const((2 * H, 2)),                        # w3 block
            _const((1, 2)),                            # b3
        ],
        out_specs=pl.BlockSpec((TB, 2), lambda i: (i, 0)),
        compiler_params=pltpu.CompilerParams(
            dimension_semantics=("parallel",),
            vmem_limit_bytes=_vmem_limit_bytes(TB, F, A, H, fuse_l2, w_itemsize),
        ),
    )(obs, action,
      packed["w1o"], packed["w1a"], packed["b1"],
      packed["w2"], packed["b2"], packed["w3"], packed["b3"])

    q = q[:B]                 # drops ragged-block garbage rows
    return q[:, 0:1], q[:, 1:2]


# ----------------------------- initialization -------------------------------

def _xavier_uniform(key, fan_in, fan_out, gain):
    # PyTorch nn.init.xavier_uniform_ with gain = calculate_gain('relu').
    limit = gain * jnp.sqrt(6.0 / (fan_in + fan_out))
    return jax.random.uniform(key, (fan_in, fan_out), jnp.float32, -limit, limit)


def _linear_bias(key, fan_in, fan_out):
    # PyTorch nn.Linear default bias init: U(-1/sqrt(fan_in), 1/sqrt(fan_in)).
    bound = 1.0 / jnp.sqrt(float(fan_in))
    return jax.random.uniform(key, (1, fan_out), jnp.float32, -bound, bound)


def init_critic_params(key, n_features, n_actions, hidden_size):
    gain_relu = jnp.sqrt(2.0)  # nn.init.calculate_gain('relu')
    d_in = n_features + n_actions
    dims = [(d_in, hidden_size), (hidden_size, hidden_size), (hidden_size, 1)]
    params = {}
    for head in ("q1", "q2"):
        head_p = {}
        for i, (fi, fo) in enumerate(dims, start=1):
            key, kw, kb = jax.random.split(key, 3)
            head_p[f"w{i}"] = _xavier_uniform(kw, fi, fo, gain_relu)
            head_p[f"b{i}"] = _linear_bias(kb, fi, fo)
        params[head] = head_p
    return params


# ----------------------------------- demo ------------------------------------

if __name__ == "__main__":
    key = jax.random.PRNGKey(0)
    B, n_features, n_actions, hidden = 8, 8, 4, 32

    k_obs, k_act, k_par = jax.random.split(key, 3)
    obs = jax.random.normal(k_obs, (B, n_features), jnp.float32)
    action = jax.random.normal(k_act, (B, n_actions), jnp.float32)
    params = init_critic_params(k_par, n_features, n_actions, hidden)

    # Pure-JAX reference
    def ref(p, x):
        h = jnp.maximum(x @ p["w1"] + p["b1"], 0.0)
        h = jnp.maximum(h @ p["w2"] + p["b2"], 0.0)
        return h @ p["w3"] + p["b3"]

    x = jnp.concatenate([obs, action], axis=1)
    r1, r2 = ref(params["q1"], x), ref(params["q2"], x)

    # 1) f32 compute, fused block-diagonal layer 2 (2H = 64 <= 256)
    packed_f32 = pack_critic_params(params, n_features, compute_dtype=jnp.float32)
    assert packed_f32["fuse_l2"]
    q1, q2 = critic_forward(obs, action, packed_f32)
    jax.block_until_ready((q1, q2))
    assert q1.shape == (B, 1) and q2.shape == (B, 1)
    assert jnp.allclose(q1, r1, atol=1e-5), "q1 (f32) mismatch"
    assert jnp.allclose(q2, r2, atol=1e-5), "q2 (f32) mismatch"

    # 2) bf16 weights, f32 activations in HBM (cast in-kernel), f32 accumulation.
    #    Valid on v5e/v6e/v7x (only MXU inputs are bf16).
    packed_bf16 = pack_critic_params(params, n_features, compute_dtype=jnp.bfloat16)
    q1b, q2b = critic_forward(obs, action, packed_bf16)
    jax.block_until_ready((q1b, q2b))
    assert jnp.allclose(q1b, r1, atol=5e-2, rtol=5e-2), "q1 (bf16) mismatch"
    assert jnp.allclose(q2b, r2, atol=5e-2, rtol=5e-2), "q2 (bf16) mismatch"

    # 3) ragged multi-tile grid (no wrapper pad) + split layer-2 path (H % 128 == 0)
    B2, hidden2 = 20, 128
    k_o2, k_a2, k_p2 = jax.random.split(jax.random.PRNGKey(1), 3)
    obs2 = jax.random.normal(k_o2, (B2, n_features), jnp.float32)
    act2 = jax.random.normal(k_a2, (B2, n_actions), jnp.float32)
    params2 = init_critic_params(k_p2, n_features, n_actions, hidden2)
    packed2 = pack_critic_params(params2, n_features,
                                 compute_dtype=jnp.float32, l2_fuse_max=0)
    assert not packed2["fuse_l2"]
    q1g, q2g = critic_forward(obs2, act2, packed2, block_b=8)
    jax.block_until_ready((q1g, q2g))
    x2 = jnp.concatenate([obs2, act2], axis=1)
    assert jnp.allclose(q1g, ref(params2["q1"], x2), atol=1e-4), "q1 (split/grid) mismatch"
    assert jnp.allclose(q2g, ref(params2["q2"], x2), atol=1e-4), "q2 (split/grid) mismatch"
    assert q1g.shape == (B2, 1) and q2g.shape == (B2, 1)

    print("KERNEL_OK")
</pallas_src>

<mosaic_0001>
module attributes {stable_mosaic.version = 11 : i64} {
  func.func @_critic_kernel_fused(%arg0: i32, %arg1: memref<8x8xf32, #tpu.memory_space<vmem>>, %arg2: memref<8x4xf32, #tpu.memory_space<vmem>>, %arg3: memref<8x64xf32, #tpu.memory_space<vmem>>, %arg4: memref<4x64xf32, #tpu.memory_space<vmem>>, %arg5: memref<1x64xf32, #tpu.memory_space<vmem>>, %arg6: memref<64x64xf32, #tpu.memory_space<vmem>>, %arg7: memref<1x64xf32, #tpu.memory_space<vmem>>, %arg8: memref<64x2xf32, #tpu.memory_space<vmem>>, %arg9: memref<1x2xf32, #tpu.memory_space<vmem>>, %arg10: memref<8x2xf32, #tpu.memory_space<vmem>>) attributes {dimension_semantics = [#tpu.dimension_semantics<parallel>], iteration_bounds = array<i64: 1>, scalar_prefetch = 0 : i64, scratch_operands = 0 : i64, tpu.core_type = #tpu.core_type<tc>, window_params = [{transform_indices = @transform_0, window_bounds = array<i64: 8, 8>}, {transform_indices = @transform_1, window_bounds = array<i64: 8, 4>}, {pipeline_mode = #tpu.pipeline_mode<synchronous>, transform_indices = @transform_2, window_bounds = array<i64: 8, 64>}, {pipeline_mode = #tpu.pipeline_mode<synchronous>, transform_indices = @transform_3, window_bounds = array<i64: 4, 64>}, {pipeline_mode = #tpu.pipeline_mode<synchronous>, transform_indices = @transform_4, window_bounds = array<i64: 1, 64>}, {pipeline_mode = #tpu.pipeline_mode<synchronous>, transform_indices = @transform_5, window_bounds = array<i64: 64, 64>}, {pipeline_mode = #tpu.pipeline_mode<synchronous>, transform_indices = @transform_6, window_bounds = array<i64: 1, 64>}, {pipeline_mode = #tpu.pipeline_mode<synchronous>, transform_indices = @transform_7, window_bounds = array<i64: 64, 2>}, {pipeline_mode = #tpu.pipeline_mode<synchronous>, transform_indices = @transform_8, window_bounds = array<i64: 1, 2>}, {transform_indices = @transform_9, window_bounds = array<i64: 8, 2>}]} {
    %c0 = arith.constant 0 : index
    %c0_0 = arith.constant 0 : index
    %0 = vector.load %arg1[%c0, %c0_0] : memref<8x8xf32, #tpu.memory_space<vmem>>, vector<8x8xf32>
    %c0_1 = arith.constant 0 : index
    %c0_2 = arith.constant 0 : index
    %1 = vector.load %arg3[%c0_1, %c0_2] : memref<8x64xf32, #tpu.memory_space<vmem>>, vector<8x64xf32>
    %cst = arith.constant dense<0.000000e+00> : vector<8x64xf32>
    %2 = tpu.matmul %0, %1, %cst {dimension_numbers = #tpu.dot_dimension_numbers<[1], [0], [0], [1], [0, 0, 1, 1], [], []>} : vector<8x8xf32>, vector<8x64xf32>, vector<8x64xf32> -> vector<8x64xf32>
    %c0_3 = arith.constant 0 : index
    %c0_4 = arith.constant 0 : index
    %3 = vector.load %arg2[%c0_3, %c0_4] : memref<8x4xf32, #tpu.memory_space<vmem>>, vector<8x4xf32>
    %c0_5 = arith.constant 0 : index
    %c0_6 = arith.constant 0 : index
    %4 = vector.load %arg4[%c0_5, %c0_6] : memref<4x64xf32, #tpu.memory_space<vmem>>, vector<4x64xf32>
    %cst_7 = arith.constant dense<0.000000e+00> : vector<8x64xf32>
    %5 = tpu.matmul %3, %4, %cst_7 {dimension_numbers = #tpu.dot_dimension_numbers<[1], [0], [0], [1], [0, 0, 1, 1], [], []>} : vector<8x4xf32>, vector<4x64xf32>, vector<8x64xf32> -> vector<8x64xf32>
    %6 = arith.addf %2, %5 : vector<8x64xf32>
    %c0_8 = arith.constant 0 : index
    %c0_9 = arith.constant 0 : index
    %7 = vector.load %arg5[%c0_8, %c0_9] : memref<1x64xf32, #tpu.memory_space<vmem>>, vector<1x64xf32>
    %8 = vector.broadcast %7 : vector<1x64xf32> to vector<8x64xf32>
    %9 = arith.addf %6, %8 : vector<8x64xf32>
    %cst_10 = arith.constant 0.000000e+00 : f32
    %10 = vector.broadcast %cst_10 : f32 to vector<8x64xf32>
    %11 = arith.maximumf %9, %10 : vector<8x64xf32>
    %c0_11 = arith.constant 0 : index
    %c0_12 = arith.constant 0 : index
    %12 = vector.load %arg6[%c0_11, %c0_12] : memref<64x64xf32, #tpu.memory_space<vmem>>, vector<64x64xf32>
    %cst_13 = arith.constant dense<0.000000e+00> : vector<8x64xf32>
    %13 = tpu.matmul %11, %12, %cst_13 {dimension_numbers = #tpu.dot_dimension_numbers<[1], [0], [0], [1], [0, 0, 1, 1], [], []>} : vector<8x64xf32>, vector<64x64xf32>, vector<8x64xf32> -> vector<8x64xf32>
    %c0_14 = arith.constant 0 : index
    %c0_15 = arith.constant 0 : index
    %14 = vector.load %arg7[%c0_14, %c0_15] : memref<1x64xf32, #tpu.memory_space<vmem>>, vector<1x64xf32>
    %15 = vector.broadcast %14 : vector<1x64xf32> to vector<8x64xf32>
    %16 = arith.addf %13, %15 : vector<8x64xf32>
    %cst_16 = arith.constant 0.000000e+00 : f32
    %17 = vector.broadcast %cst_16 : f32 to vector<8x64xf32>
    %18 = arith.maximumf %16, %17 : vector<8x64xf32>
    %c0_17 = arith.constant 0 : index
    %c0_18 = arith.constant 0 : index
    %19 = vector.load %arg8[%c0_17, %c0_18] : memref<64x2xf32, #tpu.memory_space<vmem>>, vector<64x2xf32>
    %cst_19 = arith.constant dense<0.000000e+00> : vector<8x2xf32>
    %20 = tpu.matmul %18, %19, %cst_19 {dimension_numbers = #tpu.dot_dimension_numbers<[1], [0], [0], [1], [0, 0, 1, 1], [], []>} : vector<8x64xf32>, vector<64x2xf32>, vector<8x2xf32> -> vector<8x2xf32>
    %c0_20 = arith.constant 0 : index
    %c0_21 = arith.constant 0 : index
    %21 = vector.load %arg9[%c0_20, %c0_21] : memref<1x2xf32, #tpu.memory_space<vmem>>, vector<1x2xf32>
    %22 = vector.broadcast %21 : vector<1x2xf32> to vector<8x2xf32>
    %23 = arith.addf %20, %22 : vector<8x2xf32>
    %c0_22 = arith.constant 0 : index
    %c0_23 = arith.constant 0 : index
    %24 = vector.load %arg10[%c0_22, %c0_23] : memref<8x2xf32, #tpu.memory_space<vmem>>, vector<8x2xf32>
    tpu.vector_store %arg10[%c0_22, %c0_23], %23 {strides = array<i32>} : memref<8x2xf32, #tpu.memory_space<vmem>>, vector<8x2xf32>,
    return
  }
  func.func @transform_0(%arg0: i32) -> (i32, i32) {
    %c0_i32 = arith.constant 0 : i32
    %c0_i32_0 = arith.constant 0 : i32
    return %arg0, %c0_i32 : i32, i32
  }
  func.func @transform_1(%arg0: i32) -> (i32, i32) {
    %c0_i32 = arith.constant 0 : i32
    %c0_i32_0 = arith.constant 0 : i32
    return %arg0, %c0_i32 : i32, i32
  }
  func.func @transform_2(%arg0: i32) -> (i32, i32) {
    %c0_i32 = arith.constant 0 : i32
    %c0_i32_0 = arith.constant 0 : i32
    %c0_i32_1 = arith.constant 0 : i32
    return %c0_i32, %c0_i32_0 : i32, i32
  }
  func.func @transform_3(%arg0: i32) -> (i32, i32) {
    %c0_i32 = arith.constant 0 : i32
    %c0_i32_0 = arith.constant 0 : i32
    %c0_i32_1 = arith.constant 0 : i32
    return %c0_i32, %c0_i32_0 : i32, i32
  }
  func.func @transform_4(%arg0: i32) -> (i32, i32) {
    %c0_i32 = arith.constant 0 : i32
    %c0_i32_0 = arith.constant 0 : i32
    %c0_i32_1 = arith.constant 0 : i32
    return %c0_i32, %c0_i32_0 : i32, i32
  }
  func.func @transform_5(%arg0: i32) -> (i32, i32) {
    %c0_i32 = arith.constant 0 : i32
    %c0_i32_0 = arith.constant 0 : i32
    %c0_i32_1 = arith.constant 0 : i32
    return %c0_i32, %c0_i32_0 : i32, i32
  }
  func.func @transform_6(%arg0: i32) -> (i32, i32) {
    %c0_i32 = arith.constant 0 : i32
    %c0_i32_0 = arith.constant 0 : i32
    %c0_i32_1 = arith.constant 0 : i32
    return %c0_i32, %c0_i32_0 : i32, i32
  }
  func.func @transform_7(%arg0: i32) -> (i32, i32) {
    %c0_i32 = arith.constant 0 : i32
    %c0_i32_0 = arith.constant 0 : i32
    %c0_i32_1 = arith.constant 0 : i32
    return %c0_i32, %c0_i32_0 : i32, i32
  }
  func.func @transform_8(%arg0: i32) -> (i32, i32) {
    %c0_i32 = arith.constant 0 : i32
    %c0_i32_0 = arith.constant 0 : i32
    %c0_i32_1 = arith.constant 0 : i32
    return %c0_i32, %c0_i32_0 : i32, i32
  }
  func.func @transform_9(%arg0: i32) -> (i32, i32) {
    %c0_i32 = arith.constant 0 : i32
    %c0_i32_0 = arith.constant 0 : i32
    return %arg0, %c0_i32 : i32, i32
  }
}

</mosaic_0001>

<llo_original>
// kernel: tpu_custom_call.1
$region0: #{tpu_custom_call.1}
  #allocation0 [shape = 'u32[]', space=smem, size = 0x4, offset = 0x4, fixed_abs, tag = 'smem constant byte address 0x4 - core index']
  #allocation1 [shape = 'u32[72,128]{1,0:T(1,128)}', space=vmem, size = 0x9000, scoped, tag = 'internal scratch']
  %s0 = inlined_call_operand.vmem [shape: f32[8,8], index: 0, kind: input, shape index: {}]
  %s1 = inlined_call_operand.vmem [shape: f32[8,4], index: 1, kind: input, shape index: {}]
  %s2 = inlined_call_operand.hbm [shape: f32[8,64], index: 2, kind: input, shape index: {}]
  %s3 = inlined_call_operand.vmem [shape: f32[4,64], index: 3, kind: input, shape index: {}]
  %s4 = inlined_call_operand.vmem [shape: f32[1,64], index: 4, kind: input, shape index: {}]
  %s5 = inlined_call_operand.vmem [shape: f32[64,64], index: 5, kind: input, shape index: {}]
  %s6 = inlined_call_operand.vmem [shape: f32[1,64], index: 6, kind: input, shape index: {}]
  %s7 = inlined_call_operand.vmem [shape: f32[64,2], index: 7, kind: input, shape index: {}]
  %s8 = inlined_call_operand.vmem [shape: f32[1,2], index: 8, kind: input, shape index: {}]
  %s9 = inlined_call_operand.vmem [shape: f32[8,2], index: 9, kind: output, shape index: {}]
  %s10 = sld [smem:[#allocation0]]
  $region50: #{tpu_custom_call.1} parent=0
    _
  %s12 = ssub.s32 1, %s10
  %s13 = scalar_select 0, %s12, %s10
  $region1: #{tpu_custom_call.1} parent=0
    #allocation2 [shape = 'u8[4096]{0}', space=vmem, size = 0x1000, scoped, tag = 'input window, operand 2, single buffered']
    #allocation3 [shape = 's32[1]{0}', space=sflag, size = 0x4, scoped, tag = 'scoped memory for tpu_custom_call.1']
    %14 = vsyncpa [#allocation3], 0
    // Predicated region
    $region2: #{tpu_custom_call.1} parent=1 // pred_check
      _
    $region3: #{tpu_custom_call.1} parent=1 // pred_check_branch
      %16 = sbr.rel (0) target = $region5
    $region4: #{tpu_custom_call.1} parent=1 // pred_region
      _
    $region5: #{tpu_custom_call.1} parent=1 // pred_fallthru
      _
    // Predicated region
    $region6: #{tpu_custom_call.1} parent=1 // pred_check
      _
    $region7: #{tpu_custom_call.1} parent=1 // pred_check_branch
      %18 = sbr.rel (0) target = $region9
    $region8: #{tpu_custom_call.1} parent=1 // pred_region
      _
    $region9: #{tpu_custom_call.1} parent=1 // pred_fallthru
      _
    // Predicated region
    $region10: #{tpu_custom_call.1} parent=1 // pred_check
      _
    $region11: #{tpu_custom_call.1} parent=1 // pred_check_branch
      %20 = sbr.rel (0) target = $region13
    $region12: #{tpu_custom_call.1} parent=1 // pred_region
      %22 = vsyncadd [#allocation3], 0
      %s24 = sshll.u32 %s2, 4
      %s25 = int_to_ptr.hbm [resolvable:$true] %s24
      %s26 = sshll.u32 [#allocation2], 4
      %s27 = int_to_ptr.vmem [resolvable:$true] %s26
      %29 = dma.hbm_to_vmem [thread:$0]  %s25, 128, %s27, [#allocation3]
    $region13: #{tpu_custom_call.1} parent=1 // pred_fallthru
      _
    // Predicated region
    $region14: #{tpu_custom_call.1} parent=1 // pred_check
      _
    $region15: #{tpu_custom_call.1} parent=1 // pred_check_branch
      %31 = sbr.rel (0) target = $region17
    $region16: #{tpu_custom_call.1} parent=1 // pred_region
      _
    $region17: #{tpu_custom_call.1} parent=1 // pred_fallthru
      _
    // Predicated region
    $region18: #{tpu_custom_call.1} parent=1 // pred_check
      _
    $region19: #{tpu_custom_call.1} parent=1 // pred_check_branch
      %33 = sbr.rel (0) target = $region21
    $region20: #{tpu_custom_call.1} parent=1 // pred_region
      _
    $region21: #{tpu_custom_call.1} parent=1 // pred_fallthru
      _
    // Predicated region
    $region22: #{tpu_custom_call.1} parent=1 // pred_check
      _
    $region23: #{tpu_custom_call.1} parent=1 // pred_check_branch
      %35 = sbr.rel (0) target = $region25
    $region24: #{tpu_custom_call.1} parent=1 // pred_region
      _
    $region25: #{tpu_custom_call.1} parent=1 // pred_fallthru
      _
    // Predicated region
    $region26: #{tpu_custom_call.1} parent=1 // pred_check
      _
    $region27: #{tpu_custom_call.1} parent=1 // pred_check_branch
      %37 = sbr.rel (0) target = $region29
    $region28: #{tpu_custom_call.1} parent=1 // pred_region
      _
    $region29: #{tpu_custom_call.1} parent=1 // pred_fallthru
      _
    // Predicated region
    $region30: #{tpu_custom_call.1} parent=1 // pred_check
      _
    $region31: #{tpu_custom_call.1} parent=1 // pred_check_branch
      %39 = sbr.rel (0) target = $region33
    $region32: #{tpu_custom_call.1} parent=1 // pred_region
      _
    $region33: #{tpu_custom_call.1} parent=1 // pred_fallthru
      _
    // Predicated region
    $region34: #{tpu_custom_call.1} parent=1 // pred_check
      _
    $region35: #{tpu_custom_call.1} parent=1 // pred_check_branch
      %41 = sbr.rel (0) target = $region37
    $region36: #{tpu_custom_call.1} parent=1 // pred_region
      _
    $region37: #{tpu_custom_call.1} parent=1 // pred_fallthru
      _
    // Predicated region
    $region38: #{tpu_custom_call.1} parent=1 // pred_check
      _
    $region39: #{tpu_custom_call.1} parent=1 // pred_check_branch
      %43 = sbr.rel (0) target = $region41
    $region40: #{tpu_custom_call.1} parent=1 // pred_region
      %45 = dma.done [#allocation3], 128
    $region41: #{tpu_custom_call.1} parent=1 // pred_fallthru
      _
    %v46 = vld [vmem:[%s0] sm:$0xff]
    %v47 = vld [vmem:[#allocation2] sm:$0xff]
    %v48 = vld [vmem:[%s1] sm:$0xff]
    %v49 = vld [vmem:[%s3] sm:$0xf]
    %vm50 = vcmask 31744
    %v52 = vsel %vm50, %v48, 0
    %vm54 = vcmask 1043456
    %v56 = vsel %vm54, %v49, 0
    %58 = vmatpush.msra.mxu0 0.0
    %59 = vmatpush.msra.mxu0 0.0
    %60 = vmatpush.msra.mxu0 0.0
    %61 = vmatpush.msra.mxu0 0.0
    %62 = vmatpush.msra.mxu0 0.0
    %63 = vmatpush.msra.mxu0 0.0
    %64 = vmatpush.msra.mxu0 0.0
    %65 = vmatpush.msra.mxu0 0.0
    %66 = vmatpush.msra.mxu0 0.0
    %67 = vmatpush.msra.mxu0 0.0
    %68 = vmatpush.msra.mxu0 0.0
    %69 = vmatpush.msra.mxu0 0.0
    %70 = vmatpush.msra.mxu0 0.0
    %71 = vmatpush.msra.mxu0 0.0
    %72 = vmatpush.msra.mxu0 0.0
    %73 = vmatpush.msra.mxu0 %v56
    %74 = vmatmul.f32.gmra.mxu0 %v52
    %v75 = vpop.f32.mrf.mxu0
    %v76 = vadd.f32 0.0, %v75
    %77 = vdwg.mxu0
    %vm78 = vcmask 64512
    %v80 = vsel %vm78, %v46, 0
    %82 = vmatpush.msra.mxu0 0.0
    %83 = vmatpush.msra.mxu0 0.0
    %84 = vmatpush.msra.mxu0 0.0
    %85 = vmatpush.msra.mxu0 0.0
    %86 = vmatpush.msra.mxu0 0.0
    %87 = vmatpush.msra.mxu0 0.0
    %88 = vmatpush.msra.mxu0 0.0
    %89 = vmatpush.msra.mxu0 0.0
    %90 = vmatpush.msra.mxu0 0.0
    %91 = vmatpush.msra.mxu0 0.0
    %92 = vmatpush.msra.mxu0 0.0
    %93 = vmatpush.msra.mxu0 0.0
    %94 = vmatpush.msra.mxu0 0.0
    %95 = vmatpush.msra.mxu0 0.0
    %96 = vmatpush.msra.mxu0 0.0
    %97 = vmatpush.msra.mxu0 %v47
    %98 = vmatmul.f32.gmra.mxu0 %v80
    %v99 = vpop.f32.mrf.mxu0
    %v100 = vadd.f32 %v76, %v99
    %101 = vdwg.mxu0
    %v102 = vld [vmem:[%s4] sm:$0x1]
    %v104 = vperm.slane %v102, 0
    %v106 = vadd.f32 %v100, %v104
    %v107 = vmax.f32 %v106, 0.0
    %v108 = vld [vmem:[%s5] sm:$0xff]
    %v109 = vld [vmem:[%s5 + $0x8] sm:$0xff]
    %v110 = vld [vmem:[%s5 + $0x10] sm:$0xff]
    %v111 = vld [vmem:[%s5 + $0x18] sm:$0xff]
    %v112 = vld [vmem:[%s5 + $0x20] sm:$0xff]
    %v113 = vld [vmem:[%s5 + $0x28] sm:$0xff]
    %v114 = vld [vmem:[%s5 + $0x30] sm:$0xff]
    %v115 = vld [vmem:[%s5 + $0x38] sm:$0xff]
    %v116 = vld [vmem:[%s6] sm:$0x1]
    %v118 = vperm.slane %v116, 0
    %vm120 = vcmask 523264
    %v122 = vsel %vm120, %v107, 0
    %124 = vmatpush.msra.mxu0 0.0
    %125 = vmatpush.msra.mxu0 0.0
    %126 = vmatpush.msra.mxu0 0.0
    %127 = vmatpush.msra.mxu0 0.0
    %128 = vmatpush.msra.mxu0 0.0
    %129 = vmatpush.msra.mxu0 0.0
    %130 = vmatpush.msra.mxu0 0.0
    %131 = vmatpush.msra.mxu0 0.0
    %132 = vmatpush.msra.mxu0 %v115
    %133 = vmatpush.msra.mxu0 %v114
    %134 = vmatpush.msra.mxu0 %v113
    %135 = vmatpush.msra.mxu0 %v112
    %136 = vmatpush.msra.mxu0 %v111
    %137 = vmatpush.msra.mxu0 %v110
    %138 = vmatpush.msra.mxu0 %v109
    %139 = vmatpush.msra.mxu0 %v108
    %140 = vmatmul.f32.gmra.mxu0 %v122
    %v141 = vpop.f32.mrf.mxu0
    %v142 = vadd.f32 %v118, %v141
    %143 = vdwg.mxu0
    %v144 = vmax.f32 %v142, 0.0
    %v145 = vld [vmem:[%s7] sm:$0xff]
    %v146 = vld [vmem:[%s7 + $0x8] sm:$0xff]
    %v147 = vld [vmem:[%s7 + $0x10] sm:$0xff]
    %v148 = vld [vmem:[%s7 + $0x18] sm:$0xff]
    %v149 = vld [vmem:[%s7 + $0x20] sm:$0xff]
    %v150 = vld [vmem:[%s7 + $0x28] sm:$0xff]
    %v151 = vld [vmem:[%s7 + $0x30] sm:$0xff]
    %v152 = vld [vmem:[%s7 + $0x38] sm:$0xff]
    %v153 = vld [vmem:[%s8] sm:$0x1]
    %v155 = vperm.slane %v153, 0
    %v158 = vsel %vm120, %v144, 0
    %160 = vmatpush.msra.mxu0 0.0
    %161 = vmatpush.msra.mxu0 0.0
    %162 = vmatpush.msra.mxu0 0.0
    %163 = vmatpush.msra.mxu0 0.0
    %164 = vmatpush.msra.mxu0 0.0
    %165 = vmatpush.msra.mxu0 0.0
    %166 = vmatpush.msra.mxu0 0.0
    %167 = vmatpush.msra.mxu0 0.0
    %168 = vmatpush.msra.mxu0 %v152
    %169 = vmatpush.msra.mxu0 %v151
    %170 = vmatpush.msra.mxu0 %v150
    %171 = vmatpush.msra.mxu0 %v149
    %172 = vmatpush.msra.mxu0 %v148
    %173 = vmatpush.msra.mxu0 %v147
    %174 = vmatpush.msra.mxu0 %v146
    %175 = vmatpush.msra.mxu0 %v145
    %176 = vmatmul.f32.gmra.mxu0 %v158
    %v177 = vpop.f32.mrf.mxu0
    %v178 = vadd.f32 %v155, %v177
    %179 = vdwg.mxu0
    %vm180 = vcmask 15360
    %181 = vst.msk [vmem:[%s9] sm:$0xff] %vm180, %v178
    // Predicated region
    $region42: #{tpu_custom_call.1} parent=1 // pred_check
      _
    $region43: #{tpu_custom_call.1} parent=1 // pred_check_branch
      %183 = sbr.rel (0) target = $region45
    $region44: #{tpu_custom_call.1} parent=1 // pred_region
      _
    $region45: #{tpu_custom_call.1} parent=1 // pred_fallthru
      _
    // Predicated region
    $region46: #{tpu_custom_call.1} parent=1 // pred_check
      _
    $region47: #{tpu_custom_call.1} parent=1 // pred_check_branch
      %185 = sbr.rel (0) target = $region49
    $region48: #{tpu_custom_call.1} parent=1 // pred_region
      _
    $region49: #{tpu_custom_call.1} parent=1 // pred_fallthru
      _
    %186 = vsyncpa [#allocation3], 1

</llo_original>
